<compile_context>
chip_gen: v5e
topology: v5e:2x2
jax: 0.10.0
libtpu: 0.0.40
codegen_flags: <defaults>
</compile_context>

<pallas_src>
import math

import jax
import jax.numpy as jnp
from jax.experimental import pallas as pl
from jax.experimental.pallas import tpu as pltpu


def make_pe_buffer(d_model: int, max_len: int = 5000) -> jnp.ndarray:
    """Sin/cos positional-encoding buffer, identical to the torch __init__.

    Returns (max_len, d_model) float32. (The stock torch tutorial code errors
    on odd d_model; here the cos half is sliced to d_model // 2 columns so odd
    d_model also works.)
    """
    position = jnp.arange(0, max_len, dtype=jnp.float32)[:, None]            # (max_len, 1)
    div_term = jnp.exp(
        jnp.arange(0, d_model, 2, dtype=jnp.float32) * (-math.log(10000.0) / d_model)
    )                                                                         # (ceil(D/2),)
    angles = position * div_term                                              # (max_len, ceil(D/2))
    pe = jnp.zeros((max_len, d_model), dtype=jnp.float32)
    pe = pe.at[:, 0::2].set(jnp.sin(angles))
    pe = pe.at[:, 1::2].set(jnp.cos(angles)[:, : d_model // 2])
    return pe                                                                 # (max_len, D)


def _vmem_capacity_bytes() -> int:
    """Physical VMEM per TensorCore; falls back to the smallest (v7x) value."""
    try:
        cap = getattr(pltpu.get_tpu_info(), "vmem_capacity_bytes", None)
        if cap:
            return int(cap)
    except Exception:
        pass
    return 64 * 1024 * 1024


def _pick_tile(total: int, max_tile: int, align: int) -> int:
    """Largest tile <= max_tile that is a multiple of `align`, preferring exact
    divisors of `total` (avoids a mostly-padding edge block), but never paying
    more than ~2x the grid steps just for divisibility."""
    if total <= max_tile:
        return total
    cap = max(align, (max_tile // align) * align)
    if total % align == 0:
        n = total // align
        best_div = 0
        d = 1
        while d * d <= n:
            if n % d == 0:
                for q in (d, n // d):
                    t = q * align
                    if t <= cap:
                        best_div = max(best_div, t)
            d += 1
        if best_div * 2 >= cap:
            return best_div
    return cap


def _add_pe_kernel_3d(x_ref, pe_ref, o_ref):
    # x_ref: (TB, TS, D), pe_ref: (TS, D) float32, o_ref: (TB, TS, D)
    o_ref[...] = (x_ref[...] + pe_ref[...][None, :, :]).astype(o_ref.dtype)


def _add_pe_kernel_2d(x_ref, pe_ref, o_ref):
    # x_ref: (TB, TL), pe_ref: (1, TL) float32 (sublane-broadcast), o_ref: (TB, TL)
    o_ref[...] = (x_ref[...] + pe_ref[...]).astype(o_ref.dtype)


def positional_encoding(x: jnp.ndarray, pe: jnp.ndarray, *, donate_x: bool = False) -> jnp.ndarray:
    """y = x + pe[:S] broadcast over batch.  x: (B, S, D); pe: (max_len, D) f32."""
    B, S, D = x.shape
    if pe.shape[0] < S or pe.shape[1] != D:
        raise ValueError(f"pe buffer {pe.shape} too small for x {x.shape}")

    out_dtype = jnp.promote_types(x.dtype, pe.dtype)   # torch promotion semantics
    pe_s = pe[:S]                                       # tiny; cache per (S,) in a real model

    vmem_cap = _vmem_capacity_bytes()
    bytes_x = jnp.dtype(x.dtype).itemsize
    bytes_o = jnp.dtype(out_dtype).itemsize
    bytes_pe = jnp.dtype(pe.dtype).itemsize
    # One x block + one out block together take ~1/4 of physical VMEM
    # (~8 MiB f32 x-blocks on v7x, ~16 MiB on v5e/v6e); double-buffered this
    # keeps the scoped-VMEM working set near half of VMEM.
    max_block_elems = max(1, (vmem_cap // 4) // (bytes_x + bytes_o))

    if D % 128 == 0:
        # ---- lane-aligned d_model: operate on x directly, no relayout ----
        TB = min(B, 8)
        TS = _pick_tile(S, max(8, max_block_elems // (TB * D)), 8)
        grid = (pl.cdiv(S, TS), pl.cdiv(B, TB))          # seq tile OUTER, batch INNER
        x_block = TB * TS * D * bytes_x
        o_block = TB * TS * D * bytes_o
        pe_block = TS * D * bytes_pe
        vmem_limit = int(min(2 * (x_block + o_block + pe_block) + (8 << 20),
                             3 * vmem_cap // 4))
        vmem_limit = max(vmem_limit, 32 << 20)

        kwargs = {}
        if donate_x and out_dtype == x.dtype:
            kwargs["input_output_aliases"] = {0: 0}      # donate x into the output

        return pl.pallas_call(
            _add_pe_kernel_3d,
            out_shape=jax.ShapeDtypeStruct((B, S, D), out_dtype),
            grid_spec=pltpu.PrefetchScalarGridSpec(
                num_scalar_prefetch=0,
                grid=grid,
                in_specs=[
                    pl.BlockSpec((TB, TS, D), lambda st, bt: (bt, st, 0)),
                    # pe depends only on the (outer) seq tile -> DMA'd once per
                    # seq tile and reused across the inner batch steps.
                    pl.BlockSpec((TS, D), lambda st, bt: (st, 0)),
                ],
                out_specs=pl.BlockSpec((TB, TS, D), lambda st, bt: (bt, st, 0)),
            ),
            compiler_params=pltpu.CompilerParams(
                dimension_semantics=("parallel", "parallel"),
                vmem_limit_bytes=vmem_limit,
            ),
            **kwargs,
        )(x, pe_s)

    # ---- small / unaligned d_model: flatten so stores stay lane-dense ----
    # TODO(synk): in a real model, do this flatten once at the model boundary and
    # keep the (B, S*D) layout across layers so the reshape is not a per-layer copy.
    L = S * D
    x_flat = x.reshape(B, L)
    pe_flat = pe_s.reshape(1, L)

    TB = B if B <= 8 else 8
    TL = _pick_tile(L, max(128, max_block_elems // TB), 128)
    grid = (pl.cdiv(L, TL), pl.cdiv(B, TB))              # lane tile OUTER, batch INNER
    x_block = TB * TL * bytes_x
    o_block = TB * TL * bytes_o
    pe_block = TL * bytes_pe
    vmem_limit = int(min(2 * (x_block + o_block + pe_block) + (8 << 20),
                         3 * vmem_cap // 4))
    vmem_limit = max(vmem_limit, 32 << 20)

    kwargs = {}
    if donate_x and out_dtype == x.dtype:
        kwargs["input_output_aliases"] = {0: 0}

    out_flat = pl.pallas_call(
        _add_pe_kernel_2d,
        out_shape=jax.ShapeDtypeStruct((B, L), out_dtype),
        grid_spec=pltpu.PrefetchScalarGridSpec(
            num_scalar_prefetch=0,
            grid=grid,
            in_specs=[
                pl.BlockSpec((TB, TL), lambda lt, bt: (bt, lt)),
                # pe depends only on the (outer) lane tile -> no re-DMA across
                # consecutive (inner) batch steps.
                pl.BlockSpec((1, TL), lambda lt, bt: (0, lt)),
            ],
            out_specs=pl.BlockSpec((TB, TL), lambda lt, bt: (bt, lt)),
        ),
        compiler_params=pltpu.CompilerParams(
            dimension_semantics=("parallel", "parallel"),
            vmem_limit_bytes=vmem_limit,
        ),
        **kwargs,
    )(x_flat, pe_flat)

    return out_flat.reshape(B, S, D)


if __name__ == "__main__":
    key = jax.random.PRNGKey(0)
    k1, k2 = jax.random.split(key)

    # Case 1: d_model = 32 (< 128) -> flattened lane-dense path.
    B, S, D = 2, 8, 32
    x = jax.random.normal(k1, (B, S, D), dtype=jnp.float32)
    pe = make_pe_buffer(d_model=D, max_len=5000)
    out = jax.block_until_ready(positional_encoding(x, pe))
    ref = x + pe[None, :S, :]
    assert out.shape == (B, S, D) and out.dtype == ref.dtype
    assert jnp.allclose(out, ref, atol=1e-6, rtol=1e-6), "mismatch vs reference (flat path)"

    # Case 2: d_model = 128 (lane-aligned) -> direct 3-D path, no reshape.
    B2, S2, D2 = 2, 16, 128
    x2 = jax.random.normal(k2, (B2, S2, D2), dtype=jnp.float32)
    pe2 = make_pe_buffer(d_model=D2, max_len=5000)
    out2 = jax.block_until_ready(positional_encoding(x2, pe2))
    ref2 = x2 + pe2[None, :S2, :]
    assert jnp.allclose(out2, ref2, atol=1e-6, rtol=1e-6), "mismatch vs reference (3-D path)"

    print("KERNEL_OK")
</pallas_src>

<mosaic_0001>
module attributes {stable_mosaic.version = 11 : i64} {
  func.func @_add_pe_kernel_2d(%arg0: i32, %arg1: i32, %arg2: memref<2x256xf32, #tpu.memory_space<vmem>>, %arg3: memref<1x256xf32, #tpu.memory_space<vmem>>, %arg4: memref<2x256xf32, #tpu.memory_space<vmem>>) attributes {dimension_semantics = [#tpu.dimension_semantics<parallel>, #tpu.dimension_semantics<parallel>], iteration_bounds = array<i64: 1, 1>, scalar_prefetch = 0 : i64, scratch_operands = 0 : i64, tpu.core_type = #tpu.core_type<tc>, window_params = [{transform_indices = @transform_0, window_bounds = array<i64: 2, 256>}, {transform_indices = @transform_1, window_bounds = array<i64: 1, 256>}, {transform_indices = @transform_2, window_bounds = array<i64: 2, 256>}]} {
    %c0 = arith.constant 0 : index
    %c0_0 = arith.constant 0 : index
    %0 = vector.load %arg2[%c0, %c0_0] : memref<2x256xf32, #tpu.memory_space<vmem>>, vector<2x256xf32>
    %c0_1 = arith.constant 0 : index
    %c0_2 = arith.constant 0 : index
    %1 = vector.load %arg3[%c0_1, %c0_2] : memref<1x256xf32, #tpu.memory_space<vmem>>, vector<1x256xf32>
    %2 = vector.broadcast %1 : vector<1x256xf32> to vector<2x256xf32>
    %3 = arith.addf %0, %2 : vector<2x256xf32>
    %c0_3 = arith.constant 0 : index
    %c0_4 = arith.constant 0 : index
    %4 = vector.load %arg4[%c0_3, %c0_4] : memref<2x256xf32, #tpu.memory_space<vmem>>, vector<2x256xf32>
    tpu.vector_store %arg4[%c0_3, %c0_4], %3 {strides = array<i32>} : memref<2x256xf32, #tpu.memory_space<vmem>>, vector<2x256xf32>,
    return
  }
  func.func @transform_0(%arg0: i32, %arg1: i32) -> (i32, i32) {
    %c0_i32 = arith.constant 0 : i32
    return %arg1, %arg0 : i32, i32
  }
  func.func @transform_1(%arg0: i32, %arg1: i32) -> (i32, i32) {
    %c0_i32 = arith.constant 0 : i32
    %c0_i32_0 = arith.constant 0 : i32
    return %c0_i32, %arg0 : i32, i32
  }
  func.func @transform_2(%arg0: i32, %arg1: i32) -> (i32, i32) {
    %c0_i32 = arith.constant 0 : i32
    return %arg1, %arg0 : i32, i32
  }
}

</mosaic_0001>

<llo_original>
// kernel: tpu_custom_call.1
$region0: #{tpu_custom_call.1}
  #allocation0 [shape = 'u32[]', space=smem, size = 0x4, offset = 0x4, fixed_abs, tag = 'smem constant byte address 0x4 - core index']
  #allocation1 [shape = 'u32[72,128]{1,0:T(1,128)}', space=vmem, size = 0x9000, scoped, tag = 'internal scratch']
  %s0 = inlined_call_operand.hbm [shape: f32[2,256], index: 0, kind: input, shape index: {}]
  %s1 = inlined_call_operand.hbm [shape: f32[1,256], index: 1, kind: input, shape index: {}]
  %s2 = inlined_call_operand.hbm [shape: f32[2,256], index: 2, kind: output, shape index: {}]
  %s3 = sld [smem:[#allocation0]]
  $region26: #{tpu_custom_call.1} parent=0
    _
  %s5 = ssub.s32 1, %s3
  %s6 = scalar_select 0, %s5, %s3
  $region1: #{tpu_custom_call.1} parent=0
    #allocation2 [shape = 'u8[2048]{0}', space=vmem, size = 0x800, scoped, tag = 'input window, operand 0, single buffered']
    #allocation3 [shape = 's32[1]{0}', space=sflag, size = 0x4, scoped, tag = 'scoped memory for tpu_custom_call.1']
    #allocation4 [shape = 's32[1]{0}', space=sflag, size = 0x4, scoped, tag = 'scoped memory for tpu_custom_call.1']
    #allocation5 [shape = 'u8[1024]{0}', space=vmem, size = 0x400, scoped, tag = 'input window, operand 1, single buffered']
    #allocation6 [shape = 's32[1]{0}', space=sflag, size = 0x4, scoped, tag = 'scoped memory for tpu_custom_call.1']
    #allocation7 [shape = 'u8[2048]{0}', space=vmem, size = 0x800, scoped, tag = 'output window, operand 0, single buffered']
    %7 = vsyncpa [#allocation3], 0
    %8 = vsyncpa [#allocation6], 0
    %9 = vsyncpa [#allocation4], 0
    // Predicated region
    $region2: #{tpu_custom_call.1} parent=1 // pred_check
      _
    $region3: #{tpu_custom_call.1} parent=1 // pred_check_branch
      %11 = sbr.rel (0) target = $region5
    $region4: #{tpu_custom_call.1} parent=1 // pred_region
      %13 = vsyncadd [#allocation3], 0
      %s15 = sshll.u32 %s0, 4
      %s16 = int_to_ptr.hbm [resolvable:$true] %s15
      %s17 = sshll.u32 [#allocation2], 4
      %s18 = int_to_ptr.vmem [resolvable:$true] %s17
      %20 = dma.hbm_to_vmem [thread:$0]  %s16, 64, %s18, [#allocation3]
    $region5: #{tpu_custom_call.1} parent=1 // pred_fallthru
      _
    // Predicated region
    $region6: #{tpu_custom_call.1} parent=1 // pred_check
      _
    $region7: #{tpu_custom_call.1} parent=1 // pred_check_branch
      %22 = sbr.rel (0) target = $region9
    $region8: #{tpu_custom_call.1} parent=1 // pred_region
      %24 = vsyncadd [#allocation6], 0
      %s26 = sshll.u32 %s1, 4
      %s27 = int_to_ptr.hbm [resolvable:$true] %s26
      %s28 = sshll.u32 [#allocation5], 4
      %s29 = int_to_ptr.vmem [resolvable:$true] %s28
      %31 = dma.hbm_to_vmem [thread:$0]  %s27, 32, %s29, [#allocation6]
    $region9: #{tpu_custom_call.1} parent=1 // pred_fallthru
      _
    // Predicated region
    $region10: #{tpu_custom_call.1} parent=1 // pred_check
      _
    $region11: #{tpu_custom_call.1} parent=1 // pred_check_branch
      %33 = sbr.rel (0) target = $region13
    $region12: #{tpu_custom_call.1} parent=1 // pred_region
      %35 = dma.done [#allocation3], 64
    $region13: #{tpu_custom_call.1} parent=1 // pred_fallthru
      _
    // Predicated region
    $region14: #{tpu_custom_call.1} parent=1 // pred_check
      _
    $region15: #{tpu_custom_call.1} parent=1 // pred_check_branch
      %37 = sbr.rel (0) target = $region17
    $region16: #{tpu_custom_call.1} parent=1 // pred_region
      %39 = dma.done [#allocation6], 32
    $region17: #{tpu_custom_call.1} parent=1 // pred_fallthru
      _
    %v40 = vld [vmem:[#allocation2] sm:$0xf]
    %v41 = vld [vmem:[#allocation5] sm:$0x3]
    %v43 = vperm.slane %v41, 0
    %v44 = vperm.slane %v41, 1
    %v45 = vrot.slane %v44, 6
    %vm46 = vcmask 1041408
    %v47 = vsel %vm46, %v43, %v45
    %v49 = vadd.f32 %v40, %v47
    %50 = vst [vmem:[#allocation7] sm:$0xf] %v49
    // Predicated region
    $region18: #{tpu_custom_call.1} parent=1 // pred_check
      _
    $region19: #{tpu_custom_call.1} parent=1 // pred_check_branch
      %52 = sbr.rel (0) target = $region21
    $region20: #{tpu_custom_call.1} parent=1 // pred_region
      %54 = vsyncadd [#allocation4], 0
      %s56 = sshll.u32 [#allocation7], 4
      %s57 = int_to_ptr.vmem [resolvable:$true] %s56
      %s58 = sshll.u32 %s2, 4
      %s59 = int_to_ptr.hbm [resolvable:$true] %s58
      %61 = dma.vmem_to_hbm [thread:$0]  %s57, 64, %s59, [#allocation4]
    $region21: #{tpu_custom_call.1} parent=1 // pred_fallthru
      _
    // Predicated region
    $region22: #{tpu_custom_call.1} parent=1 // pred_check
      _
    $region23: #{tpu_custom_call.1} parent=1 // pred_check_branch
      %63 = sbr.rel (0) target = $region25
    $region24: #{tpu_custom_call.1} parent=1 // pred_region
      %65 = dma.done [#allocation4], 64
    $region25: #{tpu_custom_call.1} parent=1 // pred_fallthru
      _
    %66 = vsyncpa [#allocation3], 1
    %67 = vsyncpa [#allocation6], 1
    %68 = vsyncpa [#allocation4], 1

</llo_original>
